<compile_context>
chip_gen: v7x
topology: tpu7x:2x2x1
jax: 0.10.0
libtpu: 0.0.40
codegen_flags: <defaults>
</compile_context>

<pallas_src>
import jax
import jax.numpy as jnp
from jax.experimental import pallas as pl
from jax.experimental.pallas import tpu as pltpu

_LANE_CANDIDATES = (2048, 1024, 512, 256, 128)   # widest lane-dense last dim
_SMALL_BYPASS_BYTES = 256 * 1024                 # below this, plain jnp.floor

_TPU_CONFIG = None


def _tpu_config():
    """(two_tensorcores, target_block_bytes) — best-effort, cached."""
    global _TPU_CONFIG
    if _TPU_CONFIG is None:
        kind = ""
        try:
            kind = jax.devices()[0].device_kind.lower()
        except Exception:
            pass
        two_tc = ("v7" in kind) or ("7x" in kind)
        big_blocks = two_tc or ("v6" in kind) or ("6e" in kind)
        # v5e (16 MiB scoped VMEM default) and unknown chips stay at 2 MiB.
        _TPU_CONFIG = (two_tc, (4 << 20) if big_blocks else (2 << 20))
    return _TPU_CONFIG


def _round_up(x, m):
    return ((x + m - 1) // m) * m


def _floor_kernel(x_ref, o_ref):
    # Elementwise floor on the whole VMEM tile (single VPU op per vreg).
    o_ref[...] = jnp.floor(x_ref[...])


def _floor_2d(x2d):
    """Run the floor kernel over a lane-dense (rows, lane) slab."""
    rows, lane = x2d.shape
    dtype = x2d.dtype
    itemsize = jnp.dtype(dtype).itemsize
    # Packed sublane multiple: f32 -> 8, bf16/f16 -> 16, int8/fp8 -> 32.
    mult = max(8, 32 // itemsize)
    two_tc, block_bytes = _tpu_config()

    if rows <= mult:
        tile_rows = rows                          # block == full dim (allowed)
    else:
        target_rows = max(mult, block_bytes // (itemsize * lane))
        tile_rows = min(rows, target_rows)
        tile_rows = max(mult, (tile_rows // mult) * mult)
        if two_tc:
            # Balance the grid across the two TensorCores: even block count,
            # forced >= 2 blocks (the small-tensor bypass already filtered
            # inputs where the extra grid step would matter).
            blocks = pl.cdiv(rows, tile_rows)
            if blocks == 1 and rows >= 2 * mult:
                blocks = 2
            elif blocks > 1 and blocks % 2 == 1:
                blocks += 1
            if blocks > 1:
                tile_rows = min(rows, _round_up(pl.cdiv(rows, blocks), mult))

    grid = (pl.cdiv(rows, tile_rows),)

    return pl.pallas_call(
        _floor_kernel,
        out_shape=jax.ShapeDtypeStruct((rows, lane), dtype),
        grid=grid,
        in_specs=[pl.BlockSpec((tile_rows, lane), lambda i: (i, 0))],
        out_specs=pl.BlockSpec((tile_rows, lane), lambda i: (i, 0)),
        compiler_params=pltpu.CompilerParams(
            dimension_semantics=("parallel",)
        ),
        cost_estimate=pl.CostEstimate(
            flops=rows * lane,
            transcendentals=0,
            bytes_accessed=2 * rows * lane * itemsize,
        ),
    )(x2d)


def floor_pallas(x):
    """Elementwise floor via a Pallas TPU kernel (matches torch.floor fwd)."""
    orig_shape = x.shape
    n = x.size
    if n == 0:
        return x

    # torch.floor rejects integer tensors; for int/bool floor is the identity.
    # TODO(synk): torch raises here instead of passing through.
    if not jnp.issubdtype(x.dtype, jnp.floating):
        return x

    itemsize = jnp.dtype(x.dtype).itemsize

    # Tiny tensors: pallas_call launch overhead dominates and blocks XLA
    # fusion — let XLA handle them directly.
    if n * itemsize < _SMALL_BYPASS_BYTES:
        return jnp.floor(x)

    # Fast path: pure row-major flatten (bitcast, no copy) into a lane-dense
    # (rows, lane) slab with the widest lane that divides n.
    if n % 128 == 0:
        lane = next(w for w in _LANE_CANDIDATES if n % w == 0)
        out2d = _floor_2d(x.reshape(n // lane, lane))
        return out2d.reshape(orig_shape)

    # Fallback (rare): kernel on the 128-aligned prefix, jnp.floor on the
    # < 128-element tail.  No whole-tensor pad/slice passes.
    flat = x.reshape(-1)
    n_main = (n // 128) * 128
    lane = next(w for w in _LANE_CANDIDATES if n_main % w == 0)
    head = _floor_2d(flat[:n_main].reshape(n_main // lane, lane)).reshape(-1)
    tail = jnp.floor(flat[n_main:])
    return jnp.concatenate([head, tail]).reshape(orig_shape)


# Straight-through estimator: forward = floor, backward = identity
# (mirrors FloorFunction.forward / backward).
@jax.custom_vjp
def floor_ste(x):
    return floor_pallas(x)


def _floor_ste_fwd(x):
    return floor_pallas(x), None


def _floor_ste_bwd(_, g):
    return (g,)


floor_ste.defvjp(_floor_ste_fwd, _floor_ste_bwd)


if __name__ == "__main__":
    key = jax.random.PRNGKey(0)

    # 1) Small NCHW input (batch=2, channels=4, spatial=16x16): bypass path.
    x_small = jax.random.normal(key, (2, 4, 16, 16), dtype=jnp.float32) * 5.0
    y_small = jax.block_until_ready(floor_ste(x_small))
    assert y_small.shape == x_small.shape and y_small.dtype == x_small.dtype
    assert jnp.array_equal(y_small, jnp.floor(x_small))

    # Straight-through gradient (identity).
    g = jax.block_until_ready(jax.grad(lambda t: jnp.sum(floor_ste(t)))(x_small))
    assert jnp.array_equal(g, jnp.ones_like(x_small))

    # 2) Larger NCHW input -> Pallas fast path (lane-dense f32 slab).
    k2 = jax.random.fold_in(key, 1)
    x_big = jax.random.normal(k2, (2, 4, 128, 128), dtype=jnp.float32) * 7.0
    y_big = jax.block_until_ready(floor_ste(x_big))
    assert jnp.array_equal(y_big, jnp.floor(x_big))

    # 3) bf16 input -> exercises the 16-row packed-sublane tiling + ragged grid.
    k3 = jax.random.fold_in(key, 2)
    x_bf16 = (jax.random.normal(k3, (4, 4, 384, 200), dtype=jnp.float32)
              * 9.0).astype(jnp.bfloat16)
    y_bf16 = jax.block_until_ready(floor_ste(x_bf16))
    assert jnp.array_equal(y_bf16, jnp.floor(x_bf16))

    # 4) Element count not a multiple of 128, above the bypass threshold ->
    #    128-aligned-prefix kernel + tiny jnp.floor tail.
    k4 = jax.random.fold_in(key, 3)
    x_odd = jax.random.normal(k4, (257, 257), dtype=jnp.float32) * 3.0
    y_odd = jax.block_until_ready(floor_ste(x_odd))
    assert jnp.array_equal(y_odd, jnp.floor(x_odd))

    # 5) Integer passthrough (floor of int == identity).
    x_int = jnp.arange(2 * 4 * 16 * 16, dtype=jnp.int32).reshape(2, 4, 16, 16)
    assert jnp.array_equal(floor_ste(x_int), x_int)

    print("KERNEL_OK")
</pallas_src>

<mosaic_0001>
module attributes {stable_mosaic.version = 11 : i64} {
  func.func @_floor_kernel(%arg0: i32, %arg1: memref<64x2048xf32, #tpu.memory_space<vmem>>, %arg2: memref<64x2048xf32, #tpu.memory_space<vmem>>) attributes {dimension_semantics = [#tpu.dimension_semantics<parallel>], iteration_bounds = array<i64: 1>, scalar_prefetch = 0 : i64, scratch_operands = 0 : i64, tpu.core_type = #tpu.core_type<tc>, window_params = [{transform_indices = @transform_0, window_bounds = array<i64: 64, 2048>}, {transform_indices = @transform_1, window_bounds = array<i64: 64, 2048>}]} {
    %c0 = arith.constant 0 : index
    %c0_0 = arith.constant 0 : index
    %0 = vector.load %arg1[%c0, %c0_0] : memref<64x2048xf32, #tpu.memory_space<vmem>>, vector<64x2048xf32>
    %1 = math.floor %0 : vector<64x2048xf32>
    %c0_1 = arith.constant 0 : index
    %c0_2 = arith.constant 0 : index
    %2 = vector.load %arg2[%c0_1, %c0_2] : memref<64x2048xf32, #tpu.memory_space<vmem>>, vector<64x2048xf32>
    tpu.vector_store %arg2[%c0_1, %c0_2], %1 {strides = array<i32>} : memref<64x2048xf32, #tpu.memory_space<vmem>>, vector<64x2048xf32>,
    return
  }
  func.func @transform_0(%arg0: i32) -> (i32, i32) {
    %c0_i32 = arith.constant 0 : i32
    %c0_i32_0 = arith.constant 0 : i32
    return %arg0, %c0_i32 : i32, i32
  }
  func.func @transform_1(%arg0: i32) -> (i32, i32) {
    %c0_i32 = arith.constant 0 : i32
    %c0_i32_0 = arith.constant 0 : i32
    return %arg0, %c0_i32 : i32, i32
  }
}

</mosaic_0001>

<llo_original>
// kernel: tpu_custom_call.1
$region0: #{tpu_custom_call.1}
  #allocation0 [shape = 'u32[]', space=smem, size = 0x4, offset = 0x4, fixed_abs, tag = 'smem constant byte address 0x4 - core index']
  #allocation1 [shape = 'u32[144,128]{1,0:T(1,128)}', space=vmem, size = 0x12000, scoped, tag = 'internal scratch']
  %s0 = inlined_call_operand.hbm [shape: f32[64,2048], index: 0, kind: input, shape index: {}]
  %s1 = inlined_call_operand.hbm [shape: f32[64,2048], index: 1, kind: output, shape index: {}]
  %s2 = sld [smem:[#allocation0]]
  $region18: #{tpu_custom_call.1} parent=0
    _
  %s4 = ssub.s32 1, %s2
  %s5 = scalar_select 0, %s4, %s2
  $region1: #{tpu_custom_call.1} parent=0
    #allocation2 [shape = 'u8[524288]{0}', space=vmem, size = 0x80000, scoped, tag = 'input window, operand 0, single buffered']
    #allocation3 [shape = 's32[1]{0}', space=sflag, size = 0x4, scoped, tag = 'scoped memory for tpu_custom_call.1']
    #allocation4 [shape = 's32[1]{0}', space=sflag, size = 0x4, scoped, tag = 'scoped memory for tpu_custom_call.1']
    #allocation5 [shape = 'u8[524288]{0}', space=vmem, size = 0x80000, scoped, tag = 'output window, operand 0, single buffered']
    %6 = vsyncpa [#allocation3], 0
    %7 = vsyncpa [#allocation4], 0
    // Predicated region
    $region2: #{tpu_custom_call.1} parent=1 // pred_check
      _
    $region3: #{tpu_custom_call.1} parent=1 // pred_check_branch
      %9 = sbr.rel (0) target = $region5
    $region4: #{tpu_custom_call.1} parent=1 // pred_region
      %s11 = ssub.s32 16384, 16384
      %12 = vsyncadd [#allocation3], %s11
      %s13 = sshll.u32 [#allocation2], 4
      %s14 = int_to_ptr.vmem [resolvable:$true] %s13
      %19 = dma.hbm_to_vmem [thread:$0]  %s0, 16384, %s14, [#allocation3], 2048, 2048, 128
    $region5: #{tpu_custom_call.1} parent=1 // pred_fallthru
      _
    // Predicated region
    $region6: #{tpu_custom_call.1} parent=1 // pred_check
      _
    $region7: #{tpu_custom_call.1} parent=1 // pred_check_branch
      %21 = sbr.rel (0) target = $region9
    $region8: #{tpu_custom_call.1} parent=1 // pred_region
      %22 = dma.done [#allocation3], 16384
    $region9: #{tpu_custom_call.1} parent=1 // pred_fallthru
      _
    %v23 = vld [vmem:[#allocation2] sm:$0xff]
    %v24 = vld [vmem:[#allocation2 + $0x8] sm:$0xff]
    %v25 = vld [vmem:[#allocation2 + $0x10] sm:$0xff]
    %v26 = vld [vmem:[#allocation2 + $0x18] sm:$0xff]
    %v27 = vld [vmem:[#allocation2 + $0x20] sm:$0xff]
    %v28 = vld [vmem:[#allocation2 + $0x28] sm:$0xff]
    %v29 = vld [vmem:[#allocation2 + $0x30] sm:$0xff]
    %v30 = vld [vmem:[#allocation2 + $0x38] sm:$0xff]
    %v31 = vld [vmem:[#allocation2 + $0x40] sm:$0xff]
    %v32 = vld [vmem:[#allocation2 + $0x48] sm:$0xff]
    %v33 = vld [vmem:[#allocation2 + $0x50] sm:$0xff]
    %v34 = vld [vmem:[#allocation2 + $0x58] sm:$0xff]
    %v35 = vld [vmem:[#allocation2 + $0x60] sm:$0xff]
    %v36 = vld [vmem:[#allocation2 + $0x68] sm:$0xff]
    %v37 = vld [vmem:[#allocation2 + $0x70] sm:$0xff]
    %v38 = vld [vmem:[#allocation2 + $0x78] sm:$0xff]
    %v39 = vld [vmem:[#allocation2 + $0x80] sm:$0xff]
    %v40 = vld [vmem:[#allocation2 + $0x88] sm:$0xff]
    %v41 = vld [vmem:[#allocation2 + $0x90] sm:$0xff]
    %v42 = vld [vmem:[#allocation2 + $0x98] sm:$0xff]
    %v43 = vld [vmem:[#allocation2 + $0xa0] sm:$0xff]
    %v44 = vld [vmem:[#allocation2 + $0xa8] sm:$0xff]
    %v45 = vld [vmem:[#allocation2 + $0xb0] sm:$0xff]
    %v46 = vld [vmem:[#allocation2 + $0xb8] sm:$0xff]
    %v47 = vld [vmem:[#allocation2 + $0xc0] sm:$0xff]
    %v48 = vld [vmem:[#allocation2 + $0xc8] sm:$0xff]
    %v49 = vld [vmem:[#allocation2 + $0xd0] sm:$0xff]
    %v50 = vld [vmem:[#allocation2 + $0xd8] sm:$0xff]
    %v51 = vld [vmem:[#allocation2 + $0xe0] sm:$0xff]
    %v52 = vld [vmem:[#allocation2 + $0xe8] sm:$0xff]
    %v53 = vld [vmem:[#allocation2 + $0xf0] sm:$0xff]
    %v54 = vld [vmem:[#allocation2 + $0xf8] sm:$0xff]
    %v55 = vld [vmem:[#allocation2 + $0x100] sm:$0xff]
    %v56 = vld [vmem:[#allocation2 + $0x108] sm:$0xff]
    %v57 = vld [vmem:[#allocation2 + $0x110] sm:$0xff]
    %v58 = vld [vmem:[#allocation2 + $0x118] sm:$0xff]
    %v59 = vld [vmem:[#allocation2 + $0x120] sm:$0xff]
    %v60 = vld [vmem:[#allocation2 + $0x128] sm:$0xff]
    %v61 = vld [vmem:[#allocation2 + $0x130] sm:$0xff]
    %v62 = vld [vmem:[#allocation2 + $0x138] sm:$0xff]
    %v63 = vld [vmem:[#allocation2 + $0x140] sm:$0xff]
    %v64 = vld [vmem:[#allocation2 + $0x148] sm:$0xff]
    %v65 = vld [vmem:[#allocation2 + $0x150] sm:$0xff]
    %v66 = vld [vmem:[#allocation2 + $0x158] sm:$0xff]
    %v67 = vld [vmem:[#allocation2 + $0x160] sm:$0xff]
    %v68 = vld [vmem:[#allocation2 + $0x168] sm:$0xff]
    %v69 = vld [vmem:[#allocation2 + $0x170] sm:$0xff]
    %v70 = vld [vmem:[#allocation2 + $0x178] sm:$0xff]
    %v71 = vld [vmem:[#allocation2 + $0x180] sm:$0xff]
    %v72 = vld [vmem:[#allocation2 + $0x188] sm:$0xff]
    %v73 = vld [vmem:[#allocation2 + $0x190] sm:$0xff]
    %v74 = vld [vmem:[#allocation2 + $0x198] sm:$0xff]
    %v75 = vld [vmem:[#allocation2 + $0x1a0] sm:$0xff]
    %v76 = vld [vmem:[#allocation2 + $0x1a8] sm:$0xff]
    %v77 = vld [vmem:[#allocation2 + $0x1b0] sm:$0xff]
    %v78 = vld [vmem:[#allocation2 + $0x1b8] sm:$0xff]
    %v79 = vld [vmem:[#allocation2 + $0x1c0] sm:$0xff]
    %v80 = vld [vmem:[#allocation2 + $0x1c8] sm:$0xff]
    %v81 = vld [vmem:[#allocation2 + $0x1d0] sm:$0xff]
    %v82 = vld [vmem:[#allocation2 + $0x1d8] sm:$0xff]
    %v83 = vld [vmem:[#allocation2 + $0x1e0] sm:$0xff]
    %v84 = vld [vmem:[#allocation2 + $0x1e8] sm:$0xff]
    %v85 = vld [vmem:[#allocation2 + $0x1f0] sm:$0xff]
    %v86 = vld [vmem:[#allocation2 + $0x1f8] sm:$0xff]
    %v87 = vld [vmem:[#allocation2 + $0x200] sm:$0xff]
    %v88 = vld [vmem:[#allocation2 + $0x208] sm:$0xff]
    %v89 = vld [vmem:[#allocation2 + $0x210] sm:$0xff]
    %v90 = vld [vmem:[#allocation2 + $0x218] sm:$0xff]
    %v91 = vld [vmem:[#allocation2 + $0x220] sm:$0xff]
    %v92 = vld [vmem:[#allocation2 + $0x228] sm:$0xff]
    %v93 = vld [vmem:[#allocation2 + $0x230] sm:$0xff]
    %v94 = vld [vmem:[#allocation2 + $0x238] sm:$0xff]
    %v95 = vld [vmem:[#allocation2 + $0x240] sm:$0xff]
    %v96 = vld [vmem:[#allocation2 + $0x248] sm:$0xff]
    %v97 = vld [vmem:[#allocation2 + $0x250] sm:$0xff]
    %v98 = vld [vmem:[#allocation2 + $0x258] sm:$0xff]
    %v99 = vld [vmem:[#allocation2 + $0x260] sm:$0xff]
    %v100 = vld [vmem:[#allocation2 + $0x268] sm:$0xff]
    %v101 = vld [vmem:[#allocation2 + $0x270] sm:$0xff]
    %v102 = vld [vmem:[#allocation2 + $0x278] sm:$0xff]
    %v103 = vld [vmem:[#allocation2 + $0x280] sm:$0xff]
    %v104 = vld [vmem:[#allocation2 + $0x288] sm:$0xff]
    %v105 = vld [vmem:[#allocation2 + $0x290] sm:$0xff]
    %v106 = vld [vmem:[#allocation2 + $0x298] sm:$0xff]
    %v107 = vld [vmem:[#allocation2 + $0x2a0] sm:$0xff]
    %v108 = vld [vmem:[#allocation2 + $0x2a8] sm:$0xff]
    %v109 = vld [vmem:[#allocation2 + $0x2b0] sm:$0xff]
    %v110 = vld [vmem:[#allocation2 + $0x2b8] sm:$0xff]
    %v111 = vld [vmem:[#allocation2 + $0x2c0] sm:$0xff]
    %v112 = vld [vmem:[#allocation2 + $0x2c8] sm:$0xff]
    %v113 = vld [vmem:[#allocation2 + $0x2d0] sm:$0xff]
    %v114 = vld [vmem:[#allocation2 + $0x2d8] sm:$0xff]
    %v115 = vld [vmem:[#allocation2 + $0x2e0] sm:$0xff]
    %v116 = vld [vmem:[#allocation2 + $0x2e8] sm:$0xff]
    %v117 = vld [vmem:[#allocation2 + $0x2f0] sm:$0xff]
    %v118 = vld [vmem:[#allocation2 + $0x2f8] sm:$0xff]
    %v119 = vld [vmem:[#allocation2 + $0x300] sm:$0xff]
    %v120 = vld [vmem:[#allocation2 + $0x308] sm:$0xff]
    %v121 = vld [vmem:[#allocation2 + $0x310] sm:$0xff]
    %v122 = vld [vmem:[#allocation2 + $0x318] sm:$0xff]
    %v123 = vld [vmem:[#allocation2 + $0x320] sm:$0xff]
    %v124 = vld [vmem:[#allocation2 + $0x328] sm:$0xff]
    %v125 = vld [vmem:[#allocation2 + $0x330] sm:$0xff]
    %v126 = vld [vmem:[#allocation2 + $0x338] sm:$0xff]
    %v127 = vld [vmem:[#allocation2 + $0x340] sm:$0xff]
    %v128 = vld [vmem:[#allocation2 + $0x348] sm:$0xff]
    %v129 = vld [vmem:[#allocation2 + $0x350] sm:$0xff]
    %v130 = vld [vmem:[#allocation2 + $0x358] sm:$0xff]
    %v131 = vld [vmem:[#allocation2 + $0x360] sm:$0xff]
    %v132 = vld [vmem:[#allocation2 + $0x368] sm:$0xff]
    %v133 = vld [vmem:[#allocation2 + $0x370] sm:$0xff]
    %v134 = vld [vmem:[#allocation2 + $0x378] sm:$0xff]
    %v135 = vld [vmem:[#allocation2 + $0x380] sm:$0xff]
    %v136 = vld [vmem:[#allocation2 + $0x388] sm:$0xff]
    %v137 = vld [vmem:[#allocation2 + $0x390] sm:$0xff]
    %v138 = vld [vmem:[#allocation2 + $0x398] sm:$0xff]
    %v139 = vld [vmem:[#allocation2 + $0x3a0] sm:$0xff]
    %v140 = vld [vmem:[#allocation2 + $0x3a8] sm:$0xff]
    %v141 = vld [vmem:[#allocation2 + $0x3b0] sm:$0xff]
    %v142 = vld [vmem:[#allocation2 + $0x3b8] sm:$0xff]
    %v143 = vld [vmem:[#allocation2 + $0x3c0] sm:$0xff]
    %v144 = vld [vmem:[#allocation2 + $0x3c8] sm:$0xff]
    %v145 = vld [vmem:[#allocation2 + $0x3d0] sm:$0xff]
    %v146 = vld [vmem:[#allocation2 + $0x3d8] sm:$0xff]
    %v147 = vld [vmem:[#allocation2 + $0x3e0] sm:$0xff]
    %v148 = vld [vmem:[#allocation2 + $0x3e8] sm:$0xff]
    %v149 = vld [vmem:[#allocation2 + $0x3f0] sm:$0xff]
    %v150 = vld [vmem:[#allocation2 + $0x3f8] sm:$0xff]
    %v151 = vfloor.f32 %v23
    %v152 = vfloor.f32 %v24
    %v153 = vfloor.f32 %v25
    %v154 = vfloor.f32 %v26
    %v155 = vfloor.f32 %v27
    %v156 = vfloor.f32 %v28
    %v157 = vfloor.f32 %v29
    %v158 = vfloor.f32 %v30
    %v159 = vfloor.f32 %v31
    %v160 = vfloor.f32 %v32
    %v161 = vfloor.f32 %v33
    %v162 = vfloor.f32 %v34
    %v163 = vfloor.f32 %v35
    %v164 = vfloor.f32 %v36
    %v165 = vfloor.f32 %v37
    %v166 = vfloor.f32 %v38
    %v167 = vfloor.f32 %v39
    %v168 = vfloor.f32 %v40
    %v169 = vfloor.f32 %v41
    %v170 = vfloor.f32 %v42
    %v171 = vfloor.f32 %v43
    %v172 = vfloor.f32 %v44
    %v173 = vfloor.f32 %v45
    %v174 = vfloor.f32 %v46
    %v175 = vfloor.f32 %v47
    %v176 = vfloor.f32 %v48
    %v177 = vfloor.f32 %v49
    %v178 = vfloor.f32 %v50
    %v179 = vfloor.f32 %v51
    %v180 = vfloor.f32 %v52
    %v181 = vfloor.f32 %v53
    %v182 = vfloor.f32 %v54
    %v183 = vfloor.f32 %v55
    %v184 = vfloor.f32 %v56
    %v185 = vfloor.f32 %v57
    %v186 = vfloor.f32 %v58
    %v187 = vfloor.f32 %v59
    %v188 = vfloor.f32 %v60
    %v189 = vfloor.f32 %v61
    %v190 = vfloor.f32 %v62
    %v191 = vfloor.f32 %v63
    %v192 = vfloor.f32 %v64
    %v193 = vfloor.f32 %v65
    %v194 = vfloor.f32 %v66
    %v195 = vfloor.f32 %v67
    %v196 = vfloor.f32 %v68
    %v197 = vfloor.f32 %v69
    %v198 = vfloor.f32 %v70
    %v199 = vfloor.f32 %v71
    %v200 = vfloor.f32 %v72
    %v201 = vfloor.f32 %v73
    %v202 = vfloor.f32 %v74
    %v203 = vfloor.f32 %v75
    %v204 = vfloor.f32 %v76
    %v205 = vfloor.f32 %v77
    %v206 = vfloor.f32 %v78
    %v207 = vfloor.f32 %v79
    %v208 = vfloor.f32 %v80
    %v209 = vfloor.f32 %v81
    %v210 = vfloor.f32 %v82
    %v211 = vfloor.f32 %v83
    %v212 = vfloor.f32 %v84
    %v213 = vfloor.f32 %v85
    %v214 = vfloor.f32 %v86
    %v215 = vfloor.f32 %v87
    %v216 = vfloor.f32 %v88
    %v217 = vfloor.f32 %v89
    %v218 = vfloor.f32 %v90
    %v219 = vfloor.f32 %v91
    %v220 = vfloor.f32 %v92
    %v221 = vfloor.f32 %v93
    %v222 = vfloor.f32 %v94
    %v223 = vfloor.f32 %v95
    %v224 = vfloor.f32 %v96
    %v225 = vfloor.f32 %v97
    %v226 = vfloor.f32 %v98
    %v227 = vfloor.f32 %v99
    %v228 = vfloor.f32 %v100
    %v229 = vfloor.f32 %v101
    %v230 = vfloor.f32 %v102
    %v231 = vfloor.f32 %v103
    %v232 = vfloor.f32 %v104
    %v233 = vfloor.f32 %v105
    %v234 = vfloor.f32 %v106
    %v235 = vfloor.f32 %v107
    %v236 = vfloor.f32 %v108
    %v237 = vfloor.f32 %v109
    %v238 = vfloor.f32 %v110
    %v239 = vfloor.f32 %v111
    %v240 = vfloor.f32 %v112
    %v241 = vfloor.f32 %v113
    %v242 = vfloor.f32 %v114
    %v243 = vfloor.f32 %v115
    %v244 = vfloor.f32 %v116
    %v245 = vfloor.f32 %v117
    %v246 = vfloor.f32 %v118
    %v247 = vfloor.f32 %v119
    %v248 = vfloor.f32 %v120
    %v249 = vfloor.f32 %v121
    %v250 = vfloor.f32 %v122
    %v251 = vfloor.f32 %v123
    %v252 = vfloor.f32 %v124
    %v253 = vfloor.f32 %v125
    %v254 = vfloor.f32 %v126
    %v255 = vfloor.f32 %v127
    %v256 = vfloor.f32 %v128
    %v257 = vfloor.f32 %v129
    %v258 = vfloor.f32 %v130
    %v259 = vfloor.f32 %v131
    %v260 = vfloor.f32 %v132
    %v261 = vfloor.f32 %v133
    %v262 = vfloor.f32 %v134
    %v263 = vfloor.f32 %v135
    %v264 = vfloor.f32 %v136
    %v265 = vfloor.f32 %v137
    %v266 = vfloor.f32 %v138
    %v267 = vfloor.f32 %v139
    %v268 = vfloor.f32 %v140
    %v269 = vfloor.f32 %v141
    %v270 = vfloor.f32 %v142
    %v271 = vfloor.f32 %v143
    %v272 = vfloor.f32 %v144
    %v273 = vfloor.f32 %v145
    %v274 = vfloor.f32 %v146
    %v275 = vfloor.f32 %v147
    %v276 = vfloor.f32 %v148
    %v277 = vfloor.f32 %v149
    %v278 = vfloor.f32 %v150
    %279 = vst [vmem:[#allocation5] sm:$0xff] %v151
    %280 = vst [vmem:[#allocation5 + $0x8] sm:$0xff] %v152
    %281 = vst [vmem:[#allocation5 + $0x10] sm:$0xff] %v153
    %282 = vst [vmem:[#allocation5 + $0x18] sm:$0xff] %v154
    %283 = vst [vmem:[#allocation5 + $0x20] sm:$0xff] %v155
    %284 = vst [vmem:[#allocation5 + $0x28] sm:$0xff] %v156
    %285 = vst [vmem:[#allocation5 + $0x30] sm:$0xff] %v157
    %286 = vst [vmem:[#allocation5 + $0x38] sm:$0xff] %v158
    %287 = vst [vmem:[#allocation5 + $0x40] sm:$0xff] %v159
    %288 = vst [vmem:[#allocation5 + $0x48] sm:$0xff] %v160
    %289 = vst [vmem:[#allocation5 + $0x50] sm:$0xff] %v161
    %290 = vst [vmem:[#allocation5 + $0x58] sm:$0xff] %v162
    %291 = vst [vmem:[#allocation5 + $0x60] sm:$0xff] %v163
    %292 = vst [vmem:[#allocation5 + $0x68] sm:$0xff] %v164
    %293 = vst [vmem:[#allocation5 + $0x70] sm:$0xff] %v165
    %294 = vst [vmem:[#allocation5 + $0x78] sm:$0xff] %v166
    %295 = vst [vmem:[#allocation5 + $0x80] sm:$0xff] %v167
    %296 = vst [vmem:[#allocation5 + $0x88] sm:$0xff] %v168
    %297 = vst [vmem:[#allocation5 + $0x90] sm:$0xff] %v169
    %298 = vst [vmem:[#allocation5 + $0x98] sm:$0xff] %v170
    %299 = vst [vmem:[#allocation5 + $0xa0] sm:$0xff] %v171
    %300 = vst [vmem:[#allocation5 + $0xa8] sm:$0xff] %v172
    %301 = vst [vmem:[#allocation5 + $0xb0] sm:$0xff] %v173
    %302 = vst [vmem:[#allocation5 + $0xb8] sm:$0xff] %v174
    %303 = vst [vmem:[#allocation5 + $0xc0] sm:$0xff] %v175
    %304 = vst [vmem:[#allocation5 + $0xc8] sm:$0xff] %v176
    %305 = vst [vmem:[#allocation5 + $0xd0] sm:$0xff] %v177
    %306 = vst [vmem:[#allocation5 + $0xd8] sm:$0xff] %v178
    %307 = vst [vmem:[#allocation5 + $0xe0] sm:$0xff] %v179
    %308 = vst [vmem:[#allocation5 + $0xe8] sm:$0xff] %v180
    %309 = vst [vmem:[#allocation5 + $0xf0] sm:$0xff] %v181
    %310 = vst [vmem:[#allocation5 + $0xf8] sm:$0xff] %v182
    %311 = vst [vmem:[#allocation5 + $0x100] sm:$0xff] %v183
    %312 = vst [vmem:[#allocation5 + $0x108] sm:$0xff] %v184
    %313 = vst [vmem:[#allocation5 + $0x110] sm:$0xff] %v185
    %314 = vst [vmem:[#allocation5 + $0x118] sm:$0xff] %v186
    %315 = vst [vmem:[#allocation5 + $0x120] sm:$0xff] %v187
    %316 = vst [vmem:[#allocation5 + $0x128] sm:$0xff] %v188
    %317 = vst [vmem:[#allocation5 + $0x130] sm:$0xff] %v189
    %318 = vst [vmem:[#allocation5 + $0x138] sm:$0xff] %v190
    %319 = vst [vmem:[#allocation5 + $0x140] sm:$0xff] %v191
    %320 = vst [vmem:[#allocation5 + $0x148] sm:$0xff] %v192
    %321 = vst [vmem:[#allocation5 + $0x150] sm:$0xff] %v193
    %322 = vst [vmem:[#allocation5 + $0x158] sm:$0xff] %v194
    %323 = vst [vmem:[#allocation5 + $0x160] sm:$0xff] %v195
    %324 = vst [vmem:[#allocation5 + $0x168] sm:$0xff] %v196
    %325 = vst [vmem:[#allocation5 + $0x170] sm:$0xff] %v197
    %326 = vst [vmem:[#allocation5 + $0x178] sm:$0xff] %v198
    %327 = vst [vmem:[#allocation5 + $0x180] sm:$0xff] %v199
    %328 = vst [vmem:[#allocation5 + $0x188] sm:$0xff] %v200
    %329 = vst [vmem:[#allocation5 + $0x190] sm:$0xff] %v201
    %330 = vst [vmem:[#allocation5 + $0x198] sm:$0xff] %v202
    %331 = vst [vmem:[#allocation5 + $0x1a0] sm:$0xff] %v203
    %332 = vst [vmem:[#allocation5 + $0x1a8] sm:$0xff] %v204
    %333 = vst [vmem:[#allocation5 + $0x1b0] sm:$0xff] %v205
    %334 = vst [vmem:[#allocation5 + $0x1b8] sm:$0xff] %v206
    %335 = vst [vmem:[#allocation5 + $0x1c0] sm:$0xff] %v207
    %336 = vst [vmem:[#allocation5 + $0x1c8] sm:$0xff] %v208
    %337 = vst [vmem:[#allocation5 + $0x1d0] sm:$0xff] %v209
    %338 = vst [vmem:[#allocation5 + $0x1d8] sm:$0xff] %v210
    %339 = vst [vmem:[#allocation5 + $0x1e0] sm:$0xff] %v211
    %340 = vst [vmem:[#allocation5 + $0x1e8] sm:$0xff] %v212
    %341 = vst [vmem:[#allocation5 + $0x1f0] sm:$0xff] %v213
    %342 = vst [vmem:[#allocation5 + $0x1f8] sm:$0xff] %v214
    %343 = vst [vmem:[#allocation5 + $0x200] sm:$0xff] %v215
    %344 = vst [vmem:[#allocation5 + $0x208] sm:$0xff] %v216
    %345 = vst [vmem:[#allocation5 + $0x210] sm:$0xff] %v217
    %346 = vst [vmem:[#allocation5 + $0x218] sm:$0xff] %v218
    %347 = vst [vmem:[#allocation5 + $0x220] sm:$0xff] %v219
    %348 = vst [vmem:[#allocation5 + $0x228] sm:$0xff] %v220
    %349 = vst [vmem:[#allocation5 + $0x230] sm:$0xff] %v221
    %350 = vst [vmem:[#allocation5 + $0x238] sm:$0xff] %v222
    %351 = vst [vmem:[#allocation5 + $0x240] sm:$0xff] %v223
    %352 = vst [vmem:[#allocation5 + $0x248] sm:$0xff] %v224
    %353 = vst [vmem:[#allocation5 + $0x250] sm:$0xff] %v225
    %354 = vst [vmem:[#allocation5 + $0x258] sm:$0xff] %v226
    %355 = vst [vmem:[#allocation5 + $0x260] sm:$0xff] %v227
    %356 = vst [vmem:[#allocation5 + $0x268] sm:$0xff] %v228
    %357 = vst [vmem:[#allocation5 + $0x270] sm:$0xff] %v229
    %358 = vst [vmem:[#allocation5 + $0x278] sm:$0xff] %v230
    %359 = vst [vmem:[#allocation5 + $0x280] sm:$0xff] %v231
    %360 = vst [vmem:[#allocation5 + $0x288] sm:$0xff] %v232
    %361 = vst [vmem:[#allocation5 + $0x290] sm:$0xff] %v233
    %362 = vst [vmem:[#allocation5 + $0x298] sm:$0xff] %v234
    %363 = vst [vmem:[#allocation5 + $0x2a0] sm:$0xff] %v235
    %364 = vst [vmem:[#allocation5 + $0x2a8] sm:$0xff] %v236
    %365 = vst [vmem:[#allocation5 + $0x2b0] sm:$0xff] %v237
    %366 = vst [vmem:[#allocation5 + $0x2b8] sm:$0xff] %v238
    %367 = vst [vmem:[#allocation5 + $0x2c0] sm:$0xff] %v239
    %368 = vst [vmem:[#allocation5 + $0x2c8] sm:$0xff] %v240
    %369 = vst [vmem:[#allocation5 + $0x2d0] sm:$0xff] %v241
    %370 = vst [vmem:[#allocation5 + $0x2d8] sm:$0xff] %v242
    %371 = vst [vmem:[#allocation5 + $0x2e0] sm:$0xff] %v243
    %372 = vst [vmem:[#allocation5 + $0x2e8] sm:$0xff] %v244
    %373 = vst [vmem:[#allocation5 + $0x2f0] sm:$0xff] %v245
    %374 = vst [vmem:[#allocation5 + $0x2f8] sm:$0xff] %v246
    %375 = vst [vmem:[#allocation5 + $0x300] sm:$0xff] %v247
    %376 = vst [vmem:[#allocation5 + $0x308] sm:$0xff] %v248
    %377 = vst [vmem:[#allocation5 + $0x310] sm:$0xff] %v249
    %378 = vst [vmem:[#allocation5 + $0x318] sm:$0xff] %v250
    %379 = vst [vmem:[#allocation5 + $0x320] sm:$0xff] %v251
    %380 = vst [vmem:[#allocation5 + $0x328] sm:$0xff] %v252
    %381 = vst [vmem:[#allocation5 + $0x330] sm:$0xff] %v253
    %382 = vst [vmem:[#allocation5 + $0x338] sm:$0xff] %v254
    %383 = vst [vmem:[#allocation5 + $0x340] sm:$0xff] %v255
    %384 = vst [vmem:[#allocation5 + $0x348] sm:$0xff] %v256
    %385 = vst [vmem:[#allocation5 + $0x350] sm:$0xff] %v257
    %386 = vst [vmem:[#allocation5 + $0x358] sm:$0xff] %v258
    %387 = vst [vmem:[#allocation5 + $0x360] sm:$0xff] %v259
    %388 = vst [vmem:[#allocation5 + $0x368] sm:$0xff] %v260
    %389 = vst [vmem:[#allocation5 + $0x370] sm:$0xff] %v261
    %390 = vst [vmem:[#allocation5 + $0x378] sm:$0xff] %v262
    %391 = vst [vmem:[#allocation5 + $0x380] sm:$0xff] %v263
    %392 = vst [vmem:[#allocation5 + $0x388] sm:$0xff] %v264
    %393 = vst [vmem:[#allocation5 + $0x390] sm:$0xff] %v265
    %394 = vst [vmem:[#allocation5 + $0x398] sm:$0xff] %v266
    %395 = vst [vmem:[#allocation5 + $0x3a0] sm:$0xff] %v267
    %396 = vst [vmem:[#allocation5 + $0x3a8] sm:$0xff] %v268
    %397 = vst [vmem:[#allocation5 + $0x3b0] sm:$0xff] %v269
    %398 = vst [vmem:[#allocation5 + $0x3b8] sm:$0xff] %v270
    %399 = vst [vmem:[#allocation5 + $0x3c0] sm:$0xff] %v271
    %400 = vst [vmem:[#allocation5 + $0x3c8] sm:$0xff] %v272
    %401 = vst [vmem:[#allocation5 + $0x3d0] sm:$0xff] %v273
    %402 = vst [vmem:[#allocation5 + $0x3d8] sm:$0xff] %v274
    %403 = vst [vmem:[#allocation5 + $0x3e0] sm:$0xff] %v275
    %404 = vst [vmem:[#allocation5 + $0x3e8] sm:$0xff] %v276
    %405 = vst [vmem:[#allocation5 + $0x3f0] sm:$0xff] %v277
    %406 = vst [vmem:[#allocation5 + $0x3f8] sm:$0xff] %v278
    // Predicated region
    $region10: #{tpu_custom_call.1} parent=1 // pred_check
      _
    $region11: #{tpu_custom_call.1} parent=1 // pred_check_branch
      %408 = sbr.rel (0) target = $region13
    $region12: #{tpu_custom_call.1} parent=1 // pred_region
      %s410 = ssub.s32 16384, 16384
      %411 = vsyncadd [#allocation4], %s410
      %s412 = sshll.u32 [#allocation5], 4
      %s413 = int_to_ptr.vmem [resolvable:$true] %s412
      %418 = dma.vmem_to_hbm [thread:$0]  %s413, 16384, %s1, [#allocation4], 2048, 2048, 128
    $region13: #{tpu_custom_call.1} parent=1 // pred_fallthru
      _
    // Predicated region
    $region14: #{tpu_custom_call.1} parent=1 // pred_check
      _
    $region15: #{tpu_custom_call.1} parent=1 // pred_check_branch
      %420 = sbr.rel (0) target = $region17
    $region16: #{tpu_custom_call.1} parent=1 // pred_region
      %421 = dma.done [#allocation4], 16384
    $region17: #{tpu_custom_call.1} parent=1 // pred_fallthru
      _
    %422 = vsyncpa [#allocation3], 1
    %423 = vsyncpa [#allocation4], 1

</llo_original>
